<compile_context>
chip_gen: v7x
topology: tpu7x:2x2x1
jax: 0.10.0
libtpu: 0.0.40
codegen_flags: <defaults>
</compile_context>

<pallas_src>
import jax
import jax.numpy as jnp
from jax.experimental import pallas as pl
from jax.experimental.pallas import tpu as pltpu


def _prod(xs):
    r = 1
    for v in xs:
        r *= int(v)
    return r


def _cdiv(a, b):
    return -(-a // b)


def _round_up(n, m):
    return _cdiv(n, m) * m


def _make_swap_kernel(p1, p2):
    def kernel(x_ref, o_ref):
        # Free reshape when either swapped block dim is 1; otherwise a bounded
        # per-block relayout (hidden under the DMA pipeline).
        o_ref[...] = jnp.swapaxes(x_ref[...], p1, p2)
    return kernel


def pallas_transpose(x, dim1, dim2):
    """torch.Tensor.transpose(dim1, dim2) as a Pallas TPU kernel."""
    ndim = x.ndim
    d1, d2 = dim1 % ndim, dim2 % ndim
    if d1 == d2:
        return x                                   # identity: no kernel launch
    d1, d2 = min(d1, d2), max(d1, d2)

    out_shape_full = list(x.shape)
    out_shape_full[d1], out_shape_full[d2] = out_shape_full[d2], out_shape_full[d1]
    out_shape_full = tuple(out_shape_full)

    # ---- canonicalize: merge contiguous non-swapped runs (lead / mid / trail).
    shape = x.shape
    cshape = []
    if d1 > 0:
        cshape.append(_prod(shape[:d1]))
    p1 = len(cshape); cshape.append(int(shape[d1]))
    if d2 > d1 + 1:
        cshape.append(_prod(shape[d1 + 1:d2]))
    p2 = len(cshape); cshape.append(int(shape[d2]))
    if d2 < ndim - 1:
        cshape.append(_prod(shape[d2 + 1:]))
    cshape = tuple(cshape)
    cndim = len(cshape)

    cperm = list(range(cndim))
    cperm[p1], cperm[p2] = cperm[p2], cperm[p1]
    cperm = tuple(cperm)
    out_cshape = tuple(cshape[cperm[i]] for i in range(cndim))

    xc = x.reshape(cshape)                         # contiguous merge: free

    itemsize = jnp.dtype(x.dtype).itemsize
    sublane = max(8, 32 // max(1, itemsize))       # (8,128) f32, (16,128) bf16, (32,128) i8
    total_bytes = _prod(cshape) * itemsize

    # ---- generation-aware budgets (v7x: 64 MiB VMEM/TC; v5e/v6e: 128 MiB).
    try:
        vmem_cap = int(pltpu.get_tpu_info().vmem_capacity_bytes)
    except Exception:
        vmem_cap = 64 * 1024 * 1024                # conservative (v7x-sized)
    big_vmem = vmem_cap >= 100 * 1024 * 1024
    gen_budget = (8 if big_vmem else 4) * 1024 * 1024
    # Cap the slab at total/8 so large tensors always produce >=8 parallel grid
    # steps (megacore on v7x); tiny tensors may stay a single block.
    budget = min(gen_budget, max(512 * 1024, total_bytes // 8))

    # ---- classify canonical axes against the (sublane, lane) positions of
    # BOTH the input and output layouts.
    lane_axes = {cndim - 1, cperm[cndim - 1]}
    sub_axes = ({cndim - 2, cperm[cndim - 2]} - lane_axes) if cndim >= 2 else set()
    core_axes = lane_axes | sub_axes | {p1, p2}

    def _align(a):
        if a in lane_axes:
            return 128
        if a in sub_axes:
            return sublane
        return 1

    def _floor(a):
        if a in lane_axes:
            return min(cshape[a], 256)
        if a in sub_axes:
            return min(cshape[a], sublane)
        return 1

    blocks = [cshape[a] if a in core_axes else 1 for a in range(cndim)]

    def _bytes(blks):
        return _prod(blks) * itemsize

    # Shrink core (swapped / sublane / lane) tiles -- aligned halving, sublane
    # axes before lane axes, largest first -- until the slab fits the budget.
    while _bytes(blocks) > budget:
        cands = [a for a in range(cndim)
                 if a in core_axes and blocks[a] > _floor(a)]
        if not cands:
            break
        cands.sort(key=lambda a: (a in lane_axes, -blocks[a]))
        a = cands[0]
        al = _align(a)
        blocks[a] = max(_floor(a), (blocks[a] // 2) // al * al)

    # Pack non-swapped leading axes innermost-first; take a partial block of
    # the first axis that does not fully fit, then stop (no holey blocks).
    partial = False
    for a in range(cndim - 1, -1, -1):
        if a in core_axes or partial:
            continue
        per = _bytes(blocks)
        take = min(cshape[a], max(1, budget // per))
        blocks[a] = take
        partial = take < cshape[a]

    blocks = [int(b) for b in blocks]
    n_blocks = [_cdiv(cshape[a], blocks[a]) for a in range(cndim)]
    grid_axes = [a for a in range(cndim) if n_blocks[a] > 1]
    grid = tuple(n_blocks[a] for a in grid_axes)
    grid_pos = {a: i for i, a in enumerate(grid_axes)}
    if not grid:
        grid = (1,)

    in_block = tuple(blocks)
    out_block = tuple(blocks[cperm[i]] for i in range(cndim))

    def in_index_map(*g):
        return tuple(g[grid_pos[a]] if a in grid_pos else 0 for a in range(cndim))

    def out_index_map(*g):
        # Output axis i carries the data of input axis cperm[i].
        return tuple(g[grid_pos[cperm[i]]] if cperm[i] in grid_pos else 0
                     for i in range(cndim))

    # Double-buffered in+out blocks, including (sublane,lane) padding of the
    # last two dims; cap the scoped VMEM request at 80% of physical VMEM.
    def _padded_bytes(blk):
        lead = _prod(blk[:-2]) if len(blk) > 2 else 1
        return (lead * _round_up(blk[-2], sublane) * _round_up(blk[-1], 128)
                * itemsize)

    needed = 2 * (_padded_bytes(in_block) + _padded_bytes(out_block)) + (2 << 20)
    vmem_limit = int(min(int(0.8 * vmem_cap), max(needed, 32 * 1024 * 1024)))

    out_c = pl.pallas_call(
        _make_swap_kernel(p1, p2),
        out_shape=jax.ShapeDtypeStruct(out_cshape, x.dtype),
        grid=grid,
        in_specs=[pl.BlockSpec(in_block, in_index_map)],
        out_specs=pl.BlockSpec(out_block, out_index_map),
        compiler_params=pltpu.CompilerParams(
            dimension_semantics=("parallel",) * len(grid),
            vmem_limit_bytes=vmem_limit,
        ),
        cost_estimate=pl.CostEstimate(
            flops=0, transcendentals=0, bytes_accessed=2 * total_bytes),
    )(xc)
    return out_c.reshape(out_shape_full)


class Transpose:
    """JAX/Pallas mirror of the PyTorch nn.Module (no parameters)."""

    def __init__(self, dim1, dim2):
        self.dim1 = dim1
        self.dim2 = dim2

    def __call__(self, x):
        return pallas_transpose(x, self.dim1, self.dim2)


if __name__ == "__main__":
    key = jax.random.PRNGKey(0)
    # NCHW-style small input consistent with conv-pipeline usage.
    x = jax.random.normal(key, (2, 4, 16, 16), dtype=jnp.float32)

    # Leading swaps (DMA-remap path after trailing merge), lane/sublane swaps
    # (in-VMEM relayout path), negative dims, identity.
    for (a, b) in [(0, 1), (1, 2), (2, 3), (1, 3), (-1, -2), (2, 2)]:
        y = jax.block_until_ready(Transpose(a, b)(x))
        ref = jnp.swapaxes(x, a, b)
        assert y.shape == ref.shape and y.dtype == ref.dtype, (a, b, y.shape)
        assert jnp.array_equal(y, ref), (a, b)

    # Time-major spiking-net style 3-D case: (T, B, D) -> (B, T, D).
    x3 = jax.random.normal(jax.random.PRNGKey(1), (8, 2, 32), dtype=jnp.float32)
    y3 = jax.block_until_ready(Transpose(0, 1)(x3))
    assert jnp.array_equal(y3, jnp.swapaxes(x3, 0, 1))

    # bf16 case (exercises the dtype-aware (16,128) sublane tile selection).
    xb = jax.random.normal(jax.random.PRNGKey(2), (2, 4, 16, 16)).astype(jnp.bfloat16)
    yb = jax.block_until_ready(Transpose(2, 3)(xb))
    assert jnp.array_equal(yb, jnp.swapaxes(xb, 2, 3))

    print("KERNEL_OK")
</pallas_src>

<mosaic_0001>
module attributes {stable_mosaic.version = 11 : i64} {
  func.func @kernel(%arg0: i32, %arg1: memref<2x4x256xf32, #tpu.memory_space<vmem>>, %arg2: memref<4x2x256xf32, #tpu.memory_space<vmem>>) attributes {dimension_semantics = [#tpu.dimension_semantics<parallel>], iteration_bounds = array<i64: 1>, scalar_prefetch = 0 : i64, scratch_operands = 0 : i64, tpu.core_type = #tpu.core_type<tc>, window_params = [{pipeline_mode = #tpu.pipeline_mode<synchronous>, transform_indices = @transform_0, window_bounds = array<i64: 2, 4, 256>}, {pipeline_mode = #tpu.pipeline_mode<synchronous>, transform_indices = @transform_1, window_bounds = array<i64: 4, 2, 256>}]} {
    %c0 = arith.constant 0 : index
    %c0_0 = arith.constant 0 : index
    %c0_1 = arith.constant 0 : index
    %0 = vector.load %arg1[%c0, %c0_0, %c0_1] : memref<2x4x256xf32, #tpu.memory_space<vmem>>, vector<2x4x256xf32>
    %1 = tpu.transpose %0, [1, 0, 2] : vector<2x4x256xf32> -> vector<4x2x256xf32>
    %c0_2 = arith.constant 0 : index
    %c0_3 = arith.constant 0 : index
    %c0_4 = arith.constant 0 : index
    %2 = vector.load %arg2[%c0_2, %c0_3, %c0_4] : memref<4x2x256xf32, #tpu.memory_space<vmem>>, vector<4x2x256xf32>
    tpu.vector_store %arg2[%c0_2, %c0_3, %c0_4], %1 {strides = array<i32>} : memref<4x2x256xf32, #tpu.memory_space<vmem>>, vector<4x2x256xf32>,
    return
  }
  func.func @transform_0(%arg0: i32) -> (i32, i32, i32) {
    %c0_i32 = arith.constant 0 : i32
    %c0_i32_0 = arith.constant 0 : i32
    %c0_i32_1 = arith.constant 0 : i32
    %c0_i32_2 = arith.constant 0 : i32
    return %c0_i32, %c0_i32_0, %c0_i32_1 : i32, i32, i32
  }
  func.func @transform_1(%arg0: i32) -> (i32, i32, i32) {
    %c0_i32 = arith.constant 0 : i32
    %c0_i32_0 = arith.constant 0 : i32
    %c0_i32_1 = arith.constant 0 : i32
    %c0_i32_2 = arith.constant 0 : i32
    return %c0_i32, %c0_i32_0, %c0_i32_1 : i32, i32, i32
  }
}

</mosaic_0001>

<llo_original>
// kernel: tpu_custom_call.1
$region0: #{tpu_custom_call.1}
  #allocation0 [shape = 'u32[]', space=smem, size = 0x4, offset = 0x4, fixed_abs, tag = 'smem constant byte address 0x4 - core index']
  #allocation1 [shape = 'u32[144,128]{1,0:T(1,128)}', space=vmem, size = 0x12000, scoped, tag = 'internal scratch']
  %s0 = inlined_call_operand.hbm [shape: f32[2,4,256], index: 0, kind: input, shape index: {}]
  %s1 = inlined_call_operand.hbm [shape: f32[4,2,256], index: 1, kind: output, shape index: {}]
  %s2 = sld [smem:[#allocation0]]
  $region18: #{tpu_custom_call.1} parent=0
    _
  %s4 = ssub.s32 1, %s2
  %s5 = scalar_select 0, %s4, %s2
  $region1: #{tpu_custom_call.1} parent=0
    #allocation2 [shape = 'u8[8192]{0}', space=vmem, size = 0x2000, scoped, tag = 'input window, operand 0, single buffered']
    #allocation3 [shape = 's32[1]{0}', space=sflag, size = 0x4, scoped, tag = 'scoped memory for tpu_custom_call.1']
    #allocation4 [shape = 's32[1]{0}', space=sflag, size = 0x4, scoped, tag = 'scoped memory for tpu_custom_call.1']
    #allocation5 [shape = 'u8[8192]{0}', space=vmem, size = 0x2000, scoped, tag = 'output window, operand 0, single buffered']
    %6 = vsyncpa [#allocation3], 0
    %7 = vsyncpa [#allocation4], 0
    // Predicated region
    $region2: #{tpu_custom_call.1} parent=1 // pred_check
      _
    $region3: #{tpu_custom_call.1} parent=1 // pred_check_branch
      %9 = sbr.rel (0) target = $region5
    $region4: #{tpu_custom_call.1} parent=1 // pred_region
      %s11 = ssub.s32 256, 256
      %12 = vsyncadd [#allocation3], %s11
      %s13 = sshll.u32 [#allocation2], 4
      %s14 = int_to_ptr.vmem [resolvable:$true] %s13
      %19 = dma.hbm_to_vmem [thread:$0]  %s0, 256, %s14, [#allocation3], 128, 128, 8
    $region5: #{tpu_custom_call.1} parent=1 // pred_fallthru
      _
    // Predicated region
    $region6: #{tpu_custom_call.1} parent=1 // pred_check
      _
    $region7: #{tpu_custom_call.1} parent=1 // pred_check_branch
      %21 = sbr.rel (0) target = $region9
    $region8: #{tpu_custom_call.1} parent=1 // pred_region
      %22 = dma.done [#allocation3], 256
    $region9: #{tpu_custom_call.1} parent=1 // pred_fallthru
      _
    %v23 = vld [vmem:[#allocation2] sm:$0xff]
    %v24 = vld [vmem:[#allocation2 + $0x8] sm:$0xff]
    %v25 = vcombine.high %v23, 0.0
    %v27 = vunpack.c.l.s4 1983009808
    %v28 = vunpack.c.0.s8 %v27
    %v29 = vlaneseq
    %v30 = vshrl.u32 %v29, 7
    %v31 = vsub.s32 %v28, %v30
    %v32 = vrot.slane %v23, %v31
    %v34 = vunpack.c.l.s4 1983009808
    %v35 = vunpack.c.0.s8 %v34
    %v36 = vlaneseq
    %v37 = vshrl.u32 %v36, 7
    %v38 = vsub.s32 %v35, %v37
    %v39 = vrot.slane %v25, %v38
    %v40 = vcombine.high %v24, 0.0
    %v42 = vunpack.c.l.s4 1983009808
    %v43 = vunpack.c.0.s8 %v42
    %v44 = vlaneseq
    %v45 = vshrl.u32 %v44, 7
    %v46 = vsub.s32 %v43, %v45
    %v47 = vrot.slane %v24, %v46
    %v49 = vunpack.c.l.s4 1983009808
    %v50 = vunpack.c.0.s8 %v49
    %v51 = vlaneseq
    %v52 = vshrl.u32 %v51, 7
    %v53 = vsub.s32 %v50, %v52
    %v54 = vrot.slane %v40, %v53
    %v55 = vcombine.low %v32, %v47
    %v56 = vcombine.high %v32, %v47
    %v58 = vunpack.c.l.s4 1934713408
    %v59 = vunpack.c.0.s8 %v58
    %v60 = vlaneseq
    %v61 = vshrl.u32 %v60, 7
    %v62 = vsub.s32 %v59, %v61
    %v63 = vrot.slane %v55, %v62
    %v65 = vunpack.c.l.s4 1934713408
    %v66 = vunpack.c.0.s8 %v65
    %v67 = vlaneseq
    %v68 = vshrl.u32 %v67, 7
    %v69 = vsub.s32 %v66, %v68
    %v70 = vrot.slane %v56, %v69
    %v71 = vcombine.low %v39, %v54
    %v72 = vcombine.high %v39, %v54
    %v74 = vunpack.c.l.s4 1934713408
    %v75 = vunpack.c.0.s8 %v74
    %v76 = vlaneseq
    %v77 = vshrl.u32 %v76, 7
    %v78 = vsub.s32 %v75, %v77
    %v79 = vrot.slane %v71, %v78
    %v81 = vunpack.c.l.s4 1934713408
    %v82 = vunpack.c.0.s8 %v81
    %v83 = vlaneseq
    %v84 = vshrl.u32 %v83, 7
    %v85 = vsub.s32 %v82, %v84
    %v86 = vrot.slane %v72, %v85
    %v87 = vcombine.low %v63, %v79
    %v88 = vcombine.high %v63, %v79
    %v89 = vcombine.low %v70, %v86
    %v90 = vcombine.high %v70, %v86
    %v96 = vunpack.c.l.s4 1983009808
    %v97 = vunpack.c.0.s8 %v96
    %v98 = vlaneseq
    %v99 = vshrl.u32 %v98, 7
    %v100 = vsub.s32 %v97, %v99
    %v101 = vrot.slane %v87, %v100
    %v103 = vunpack.c.l.s4 1983009808
    %v104 = vunpack.c.0.s8 %v103
    %v105 = vlaneseq
    %v106 = vshrl.u32 %v105, 7
    %v107 = vsub.s32 %v104, %v106
    %v108 = vrot.slane %v88, %v107
    %v110 = vunpack.c.l.s4 1983009808
    %v111 = vunpack.c.0.s8 %v110
    %v112 = vlaneseq
    %v113 = vshrl.u32 %v112, 7
    %v114 = vsub.s32 %v111, %v113
    %v115 = vrot.slane %v89, %v114
    %v117 = vunpack.c.l.s4 1983009808
    %v118 = vunpack.c.0.s8 %v117
    %v119 = vlaneseq
    %v120 = vshrl.u32 %v119, 7
    %v121 = vsub.s32 %v118, %v120
    %v122 = vrot.slane %v90, %v121
    %127 = vst [vmem:[#allocation5] sm:$0xf] %v101
    %128 = vst [vmem:[#allocation5 + $0x4] sm:$0xf] %v108
    %129 = vst [vmem:[#allocation5 + $0x8] sm:$0xf] %v115
    %130 = vst [vmem:[#allocation5 + $0xc] sm:$0xf] %v122
    // Predicated region
    $region10: #{tpu_custom_call.1} parent=1 // pred_check
      _
    $region11: #{tpu_custom_call.1} parent=1 // pred_check_branch
      %132 = sbr.rel (0) target = $region13
    $region12: #{tpu_custom_call.1} parent=1 // pred_region
      %s134 = ssub.s32 256, 256
      %135 = vsyncadd [#allocation4], %s134
      %s136 = sshll.u32 [#allocation5], 4
      %s137 = int_to_ptr.vmem [resolvable:$true] %s136
      %142 = dma.vmem_to_hbm [thread:$0]  %s137, 256, %s1, [#allocation4], 64, 64, 4
    $region13: #{tpu_custom_call.1} parent=1 // pred_fallthru
      _
    // Predicated region
    $region14: #{tpu_custom_call.1} parent=1 // pred_check
      _
    $region15: #{tpu_custom_call.1} parent=1 // pred_check_branch
      %144 = sbr.rel (0) target = $region17
    $region16: #{tpu_custom_call.1} parent=1 // pred_region
      %145 = dma.done [#allocation4], 256
    $region17: #{tpu_custom_call.1} parent=1 // pred_fallthru
      _
    %146 = vsyncpa [#allocation3], 1
    %147 = vsyncpa [#allocation4], 1

</llo_original>
